<compile_context>
chip_gen: v6e
topology: v6e:2x2x1
jax: 0.10.0
libtpu: 0.0.40
codegen_flags: <defaults>
</compile_context>

<pallas_src>
import functools

import jax
import jax.numpy as jnp
from jax.experimental import pallas as pl
from jax.experimental.pallas import tpu as pltpu


def _round_up(v, m):
    return -(-v // m) * m


def _heads_kernel(feat_ref, w_ref, b_ref, grid_ref,
                  coords_ref, hm_ref, off_ref,
                  m_sc, l_sc, sx_sc, sy_sc,
                  *, n, thw, n_hw):
    # feat_ref  : (1, C, thw)  bf16 feature tile (batch elem b, spatial tile s)
    # w_ref     : (KP, C)      bf16 stacked [wh_kp ; wh_vote ; wo_vote], zero-padded rows
    # b_ref     : (KP, 1)      f32 stacked biases
    # grid_ref  : (2, thw)     f32: row 0 = grid_x tile, row 1 = grid_y tile
    # coords_ref: (1, 2n, 2)   rows [:n] keypoint head, rows [n:] vote head
    # hm_ref    : (1, n, HW)   vote-head softmax heatmap (resident across hw axis)
    # off_ref   : (1, 2n, thw) vote-head offset conv output tile
    # m/l/sx/sy : (2n, 1)      online-softmax running stats
    s = pl.program_id(1)

    @pl.when(s == 0)
    def _init():
        m_sc[...] = jnp.full_like(m_sc, -jnp.inf)
        l_sc[...] = jnp.zeros_like(l_sc)
        sx_sc[...] = jnp.zeros_like(sx_sc)
        sy_sc[...] = jnp.zeros_like(sy_sc)
        hm_ref[...] = jnp.zeros_like(hm_ref)
        coords_ref[...] = jnp.zeros_like(coords_ref)

    # One fused MXU matmul (bf16 in, f32 accumulate) covering all three 1x1 convs.
    out = jnp.dot(w_ref[...], feat_ref[0],
                  preferred_element_type=jnp.float32) + b_ref[...]        # (KP, thw) f32

    h = out[:2 * n, :]             # softmax rows: [:n] kp heatmap, [n:2n] vote heatmap
    gx = grid_ref[0:1, :]          # (1, thw)
    gy = grid_ref[1:2, :]

    # Flash-style online softmax statistics over the tiled spatial (lane) axis.
    m_prev = m_sc[...]                                                    # (2n, 1)
    m_new = jnp.maximum(m_prev, jnp.max(h, axis=-1, keepdims=True))
    alpha = jnp.exp(m_prev - m_new)                                       # (2n, 1)
    e = jnp.exp(h - m_new)                                                # (2n, thw)

    l_sc[...] = alpha * l_sc[...] + jnp.sum(e, axis=-1, keepdims=True)
    sx_sc[...] = alpha * sx_sc[...] + jnp.sum(e * gx, axis=-1, keepdims=True)
    sy_sc[...] = alpha * sy_sc[...] + jnp.sum(e * gy, axis=-1, keepdims=True)
    m_sc[...] = m_new

    # Vote-head heatmap accumulator (un-normalized exp, resident in VMEM): rescale what
    # we have so far by alpha, then drop this tile's values into its 128-aligned window.
    e_v = e[n:2 * n, :]
    if n_hw == 1:
        hm_ref[0] = e_v
    else:
        hm_ref[0] = hm_ref[0] * alpha[n:2 * n, :]
        start = pl.multiple_of(s * thw, thw)
        hm_ref[0, :, pl.ds(start, thw)] = e_v

    # Vote-head offsets: plain conv rows, streamed straight out per spatial tile.
    off_ref[0] = out[2 * n:4 * n, :].astype(off_ref.dtype)

    # Epilogue: exact normalization, only where it is actually needed (kp rows never
    # get a full-HW normalization; their coords use the running stats directly).
    @pl.when(s == pl.num_programs(1) - 1)
    def _finalize():
        inv_l = 1.0 / l_sc[...]                      # exact divide on a tiny (2n,1) tensor
        xy = jnp.concatenate([sx_sc[...], sy_sc[...]], axis=1) * inv_l    # (2n, 2)
        coords_ref[0] = xy.astype(coords_ref.dtype)
        hm_ref[0] = (hm_ref[0] * inv_l[n:2 * n, :]).astype(hm_ref.dtype)


def _vmem_capacity_bytes():
    try:
        cap = getattr(pltpu.get_tpu_info(), "vmem_capacity_bytes", None)
        if cap:
            return int(cap)
    except Exception:
        pass
    return 64 << 20        # conservative fallback (v7x-sized per-core VMEM)


def mask_encoder_heads_forward(feat_nchw, wh_kp, bh_kp, wh_v, bh_v, wo_v, bo_v,
                               *, H, W, n_points,
                               channels_last_offsets=False, hw_tile=None):
    B, C, H_, W_ = feat_nchw.shape
    assert (H_, W_) == (H, W)
    HW = H * W
    n = n_points
    n4 = 4 * n
    KP = _round_up(n4, 8)            # pad stacked-conv rows to a full sublane tile

    # bf16 into the MXU: halves the dominant feat HBM stream and avoids f32 MXU
    # emulation. (Ideally the backbone already emits bf16 so this cast fuses away.)
    feat = feat_nchw.reshape(B, C, HW).astype(jnp.bfloat16)

    # Stacked 1x1-conv weights: rows [0:n) kp-heatmap, [n:2n) vote-heatmap,
    # [2n:4n) vote-offsets, remaining rows zero padding.
    w_stack = jnp.concatenate([wh_kp, wh_v, wo_v], axis=0)
    b_stack = jnp.concatenate([bh_kp, bh_v, bo_v], axis=0)
    if KP != n4:
        w_stack = jnp.pad(w_stack, ((0, KP - n4), (0, 0)))
        b_stack = jnp.pad(b_stack, ((0, KP - n4),))
    w_stack = w_stack.astype(jnp.bfloat16)
    b_stack = b_stack.astype(jnp.float32).reshape(KP, 1)

    # Soft-argmax grid matching torch.linspace(0,1,*) + meshgrid(ys, xs):
    # row 0 = x (varies along W), row 1 = y (varies along H), row-major flat.
    xs = jnp.linspace(0.0, 1.0, W, dtype=jnp.float32)
    ys = jnp.linspace(0.0, 1.0, H, dtype=jnp.float32)
    gx = jnp.broadcast_to(xs[None, :], (H, W)).reshape(HW)
    gy = jnp.broadcast_to(ys[:, None], (H, W)).reshape(HW)
    grid_xy = jnp.stack([gx, gy], axis=0)                                 # (2, HW)

    # Generation-aware spatial tile: largest 128-multiple divisor of HW whose per-step
    # working set (streamed tiles, double buffers AND f32 kernel intermediates) fits a
    # budget derived from this chip's physical VMEM.
    vmem_cap = _vmem_capacity_bytes()
    resident = 2 * n * HW * 4 + KP * C * 2 + KP * 4 + 2 * HW * 4 + 64 * n

    def _per_step_bytes(t):
        streamed = 2 * (C * t * 2      # feat tile (bf16), double-buffered
                        + 2 * t * 4    # grid tile (f32)
                        + 2 * n * t * 4)   # offset output tile (f32)
        interm = 3 * KP * t * 4        # conv out / exp / exp*grid f32 temporaries
        return streamed + interm

    if hw_tile is None:
        budget = max(int(0.45 * vmem_cap) - resident, 1 << 20)
        cands = [d for d in range(128, HW + 1, 128) if HW % d == 0] or [HW]
        thw = cands[0]
        for d in cands:                # ascending; cost is monotonic in d
            if _per_step_bytes(d) <= budget:
                thw = d
    else:
        thw = hw_tile
        assert HW % thw == 0 and (thw % 128 == 0 or thw == HW)
    n_hw = HW // thw

    # Explicit scoped-VMEM request: covers the working set with headroom, never above
    # ~85% of this chip's physical VMEM (raises v5e/v6e's low default, safe on v7x).
    need = resident + _per_step_bytes(thw) + (4 << 20)
    vmem_limit = int(min(max(need, 32 << 20), int(0.85 * vmem_cap)))

    kernel = functools.partial(_heads_kernel, n=n, thw=thw, n_hw=n_hw)

    out_shapes = (
        jax.ShapeDtypeStruct((B, 2 * n, 2), jnp.float32),    # coords (kp rows | vote rows)
        jax.ShapeDtypeStruct((B, n, HW), jnp.float32),       # vote-head softmax heatmap
        jax.ShapeDtypeStruct((B, 2 * n, HW), jnp.float32),   # vote-head offsets (flat)
    )

    coords_all, hm_flat, off_flat = pl.pallas_call(
        kernel,
        out_shape=out_shapes,
        grid=(B, n_hw),
        in_specs=[
            pl.BlockSpec((1, C, thw), lambda b, s: (b, 0, s)),
            pl.BlockSpec((KP, C), lambda b, s: (0, 0)),
            pl.BlockSpec((KP, 1), lambda b, s: (0, 0)),
            pl.BlockSpec((2, thw), lambda b, s: (0, s)),
        ],
        out_specs=(
            pl.BlockSpec((1, 2 * n, 2), lambda b, s: (b, 0, 0)),   # written once per b
            pl.BlockSpec((1, n, HW), lambda b, s: (b, 0, 0)),      # resident across s
            pl.BlockSpec((1, 2 * n, thw), lambda b, s: (b, 0, s)),
        ),
        scratch_shapes=[
            pltpu.VMEM((2 * n, 1), jnp.float32),   # running max
            pltpu.VMEM((2 * n, 1), jnp.float32),   # running sum(exp)
            pltpu.VMEM((2 * n, 1), jnp.float32),   # running sum(exp * grid_x)
            pltpu.VMEM((2 * n, 1), jnp.float32),   # running sum(exp * grid_y)
        ],
        compiler_params=pltpu.CompilerParams(
            dimension_semantics=("parallel", "arbitrary"),
            vmem_limit_bytes=vmem_limit),
    )(feat, w_stack, b_stack, grid_xy)

    # Thin glue only: slices + data-movement-free reshapes.
    coords_reg = coords_all[:, :n, :]          # KeypointHead coords, (B, n, 2)
    coords_vote = coords_all[:, n:, :]         # VoteHead coords,     (B, n, 2)
    hm = hm_flat.reshape(B, n, H, W)
    off = off_flat.reshape(B, n, 2, H, W)
    if channels_last_offsets:
        # PyTorch-matching (B, n, H, W, 2) layout; default off per perf review (pure
        # HBM re-layout of the largest output into a lane-width-2 layout).
        off = off.transpose(0, 1, 3, 4, 2)
    return coords_reg, coords_vote, hm, off


def reference_forward(feat_nchw, wh_kp, bh_kp, wh_v, bh_v, wo_v, bo_v,
                      *, H, W, n_points):
    """Pure-JAX mirror of the PyTorch KeypointHead + VoteHead forward."""
    B, C = feat_nchw.shape[:2]
    HW = H * W
    f = feat_nchw.astype(jnp.float32).reshape(B, C, HW)
    xs = jnp.linspace(0.0, 1.0, W, dtype=jnp.float32)
    ys = jnp.linspace(0.0, 1.0, H, dtype=jnp.float32)
    gx = jnp.broadcast_to(xs[None, :], (H, W)).reshape(HW)
    gy = jnp.broadcast_to(ys[:, None], (H, W)).reshape(HW)

    def soft_argmax(wh, bh):
        h = jnp.einsum('nc,bcs->bns', wh.astype(jnp.float32), f) + bh[None, :, None]
        p = jax.nn.softmax(h, axis=-1)
        x = (p * gx[None, None]).sum(-1)
        y = (p * gy[None, None]).sum(-1)
        return jnp.stack([x, y], axis=-1), p

    coords_reg, _ = soft_argmax(wh_kp, bh_kp)
    coords_vote, p_v = soft_argmax(wh_v, bh_v)
    off = jnp.einsum('oc,bcs->bos', wo_v.astype(jnp.float32), f) + bo_v[None, :, None]
    off = off.reshape(B, n_points, 2, H, W).transpose(0, 1, 3, 4, 2)
    return coords_reg, coords_vote, p_v.reshape(B, n_points, H, W), off


def _run_case(key, *, B, C, H, W, N, hw_tile=None):
    keys = jax.random.split(key, 7)
    feat = jax.random.normal(keys[0], (B, C, H, W), dtype=jnp.float32)
    # Conv2d(kernel_size=1) weights: [out, in, 1, 1] -> squeezed to [out, in]
    wh_kp = 0.1 * jax.random.normal(keys[1], (N, C), dtype=jnp.float32)
    bh_kp = 0.1 * jax.random.normal(keys[2], (N,), dtype=jnp.float32)
    wh_v = 0.1 * jax.random.normal(keys[3], (N, C), dtype=jnp.float32)
    bh_v = 0.1 * jax.random.normal(keys[4], (N,), dtype=jnp.float32)
    wo_v = 0.1 * jax.random.normal(keys[5], (2 * N, C), dtype=jnp.float32)
    bo_v = 0.1 * jax.random.normal(keys[6], (2 * N,), dtype=jnp.float32)

    # channels_last_offsets=True here only so the checked tensor is literally the
    # PyTorch-layout output; the perf default is False (review item).
    outs = mask_encoder_heads_forward(
        feat, wh_kp, bh_kp, wh_v, bh_v, wo_v, bo_v,
        H=H, W=W, n_points=N, channels_last_offsets=True, hw_tile=hw_tile)
    outs = jax.block_until_ready(outs)
    coords_reg, coords_vote, hm, off = outs

    assert coords_reg.shape == (B, N, 2)
    assert coords_vote.shape == (B, N, 2)
    assert hm.shape == (B, N, H, W)
    assert off.shape == (B, N, H, W, 2)

    # Tight check: reference fed the same bf16-rounded feat/weights the kernel consumes,
    # so this isolates kernel structure from the intended bf16 matmul rounding.
    rd = lambda a: a.astype(jnp.bfloat16).astype(jnp.float32)
    r_reg, r_vote, r_hm, r_off = reference_forward(
        rd(feat), rd(wh_kp), bh_kp, rd(wh_v), bh_v, rd(wo_v), bo_v,
        H=H, W=W, n_points=N)
    assert bool(jnp.allclose(coords_reg, r_reg, atol=1e-3)), "coords_reg mismatch"
    assert bool(jnp.allclose(coords_vote, r_vote, atol=1e-3)), "coords_vote mismatch"
    assert bool(jnp.allclose(hm, r_hm, atol=1e-3)), "heatmap mismatch"
    assert bool(jnp.allclose(off, r_off, atol=2e-3)), "offsets mismatch"

    # Loose sanity check vs the exact f32 module semantics (bf16 rounding only).
    f_reg, f_vote, f_hm, f_off = reference_forward(
        feat, wh_kp, bh_kp, wh_v, bh_v, wo_v, bo_v, H=H, W=W, n_points=N)
    assert bool(jnp.allclose(coords_reg, f_reg, atol=2e-2))
    assert bool(jnp.allclose(coords_vote, f_vote, atol=2e-2))
    assert bool(jnp.allclose(hm, f_hm, atol=5e-3))
    assert bool(jnp.allclose(off, f_off, atol=5e-2))


if __name__ == "__main__":
    key = jax.random.PRNGKey(0)
    k1, k2 = jax.random.split(key)
    # Case 1: single spatial tile (HW == 128), batch-parallel grid.
    _run_case(k1, B=2, C=8, H=8, W=16, N=4)
    # Case 2: multi-tile spatial axis -> exercises the online softmax, the resident
    # heatmap accumulator and the padded stacked-weight rows (4n=12 -> KP=16).
    _run_case(k2, B=1, C=16, H=16, W=16, N=3, hw_tile=128)
    print("KERNEL_OK")
</pallas_src>

<mosaic_0001>
module attributes {stable_mosaic.version = 11 : i64} {
  func.func @_heads_kernel(%arg0: i32, %arg1: i32, %arg2: memref<1x8x128xbf16, #tpu.memory_space<vmem>>, %arg3: memref<16x8xbf16, #tpu.memory_space<vmem>>, %arg4: memref<16x1xf32, #tpu.memory_space<vmem>>, %arg5: memref<2x128xf32, #tpu.memory_space<vmem>>, %arg6: memref<1x8x2xf32, #tpu.memory_space<vmem>>, %arg7: memref<1x4x128xf32, #tpu.memory_space<vmem>>, %arg8: memref<1x8x128xf32, #tpu.memory_space<vmem>>, %arg9: memref<8x1xf32, #tpu.memory_space<vmem>>, %arg10: memref<8x1xf32, #tpu.memory_space<vmem>>, %arg11: memref<8x1xf32, #tpu.memory_space<vmem>>, %arg12: memref<8x1xf32, #tpu.memory_space<vmem>>) attributes {dimension_semantics = [#tpu.dimension_semantics<parallel>, #tpu.dimension_semantics<arbitrary>], iteration_bounds = array<i64: 2, 1>, scalar_prefetch = 0 : i64, scratch_operands = 4 : i64, tpu.core_type = #tpu.core_type<tc>, window_params = [{transform_indices = @transform_0, window_bounds = array<i64: 1, 8, 128>}, {pipeline_mode = #tpu.pipeline_mode<synchronous>, transform_indices = @transform_1, window_bounds = array<i64: 16, 8>}, {pipeline_mode = #tpu.pipeline_mode<synchronous>, transform_indices = @transform_2, window_bounds = array<i64: 16, 1>}, {transform_indices = @transform_3, window_bounds = array<i64: 2, 128>}, {transform_indices = @transform_4, window_bounds = array<i64: 1, 8, 2>}, {transform_indices = @transform_5, window_bounds = array<i64: 1, 4, 128>}, {transform_indices = @transform_6, window_bounds = array<i64: 1, 8, 128>}]} {
    %c0_i32 = arith.constant 0 : i32
    %0 = arith.cmpi eq, %arg1, %c0_i32 : i32
    %1 = arith.extui %0 : i1 to i32
    %c0_i32_0 = arith.constant 0 : i32
    %2 = arith.cmpi ne, %1, %c0_i32_0 : i32
    scf.if %2 {
      %cst_38 = arith.constant 0xFF800000 : f32
      %56 = vector.broadcast %cst_38 : f32 to vector<8x1xf32>
      %c0_39 = arith.constant 0 : index
      %c0_40 = arith.constant 0 : index
      %57 = vector.load %arg9[%c0_39, %c0_40] : memref<8x1xf32, #tpu.memory_space<vmem>>, vector<8x1xf32>
      tpu.vector_store %arg9[%c0_39, %c0_40], %56 {strides = array<i32>} : memref<8x1xf32, #tpu.memory_space<vmem>>, vector<8x1xf32>,
      %cst_41 = arith.constant 0.000000e+00 : f32
      %58 = vector.broadcast %cst_41 : f32 to vector<8x1xf32>
      %c0_42 = arith.constant 0 : index
      %c0_43 = arith.constant 0 : index
      %59 = vector.load %arg10[%c0_42, %c0_43] : memref<8x1xf32, #tpu.memory_space<vmem>>, vector<8x1xf32>
      tpu.vector_store %arg10[%c0_42, %c0_43], %58 {strides = array<i32>} : memref<8x1xf32, #tpu.memory_space<vmem>>, vector<8x1xf32>,
      %cst_44 = arith.constant 0.000000e+00 : f32
      %60 = vector.broadcast %cst_44 : f32 to vector<8x1xf32>
      %c0_45 = arith.constant 0 : index
      %c0_46 = arith.constant 0 : index
      %61 = vector.load %arg11[%c0_45, %c0_46] : memref<8x1xf32, #tpu.memory_space<vmem>>, vector<8x1xf32>
      tpu.vector_store %arg11[%c0_45, %c0_46], %60 {strides = array<i32>} : memref<8x1xf32, #tpu.memory_space<vmem>>, vector<8x1xf32>,
      %cst_47 = arith.constant 0.000000e+00 : f32
      %62 = vector.broadcast %cst_47 : f32 to vector<8x1xf32>
      %c0_48 = arith.constant 0 : index
      %c0_49 = arith.constant 0 : index
      %63 = vector.load %arg12[%c0_48, %c0_49] : memref<8x1xf32, #tpu.memory_space<vmem>>, vector<8x1xf32>
      tpu.vector_store %arg12[%c0_48, %c0_49], %62 {strides = array<i32>} : memref<8x1xf32, #tpu.memory_space<vmem>>, vector<8x1xf32>,
      %cst_50 = arith.constant 0.000000e+00 : f32
      %64 = vector.broadcast %cst_50 : f32 to vector<1x4x128xf32>
      %c0_51 = arith.constant 0 : index
      %c0_52 = arith.constant 0 : index
      %c0_53 = arith.constant 0 : index
      %65 = vector.load %arg7[%c0_51, %c0_52, %c0_53] : memref<1x4x128xf32, #tpu.memory_space<vmem>>, vector<1x4x128xf32>
      tpu.vector_store %arg7[%c0_51, %c0_52, %c0_53], %64 {strides = array<i32>} : memref<1x4x128xf32, #tpu.memory_space<vmem>>, vector<1x4x128xf32>,
      %cst_54 = arith.constant 0.000000e+00 : f32
      %66 = vector.broadcast %cst_54 : f32 to vector<1x8x2xf32>
      %c0_55 = arith.constant 0 : index
      %c0_56 = arith.constant 0 : index
      %c0_57 = arith.constant 0 : index
      %67 = vector.load %arg6[%c0_55, %c0_56, %c0_57] : memref<1x8x2xf32, #tpu.memory_space<vmem>>, vector<1x8x2xf32>
      tpu.vector_store %arg6[%c0_55, %c0_56, %c0_57], %66 {strides = array<i32>} : memref<1x8x2xf32, #tpu.memory_space<vmem>>, vector<1x8x2xf32>,
    } else {
    }
    %c0 = arith.constant 0 : index
    %c0_1 = arith.constant 0 : index
    %3 = vector.load %arg3[%c0, %c0_1] : memref<16x8xbf16, #tpu.memory_space<vmem>>, vector<16x8xbf16>
    %c0_2 = arith.constant 0 : index
    %c0_3 = arith.constant 0 : index
    %c0_4 = arith.constant 0 : index
    %4 = vector.load %arg2[%c0_2, %c0_3, %c0_4] : memref<1x8x128xbf16, #tpu.memory_space<vmem>>, vector<1x8x128xbf16>
    %5 = vector.shape_cast %4 : vector<1x8x128xbf16> to vector<8x128xbf16>
    %cst = arith.constant dense<0.000000e+00> : vector<16x128xf32>
    %6 = tpu.matmul %3, %5, %cst {dimension_numbers = #tpu.dot_dimension_numbers<[1], [0], [0], [1], [0, 0, 1, 1], [], []>} : vector<16x8xbf16>, vector<8x128xbf16>, vector<16x128xf32> -> vector<16x128xf32>
    %c0_5 = arith.constant 0 : index
    %c0_6 = arith.constant 0 : index
    %7 = vector.load %arg4[%c0_5, %c0_6] : memref<16x1xf32, #tpu.memory_space<vmem>>, vector<16x1xf32>
    %8 = vector.broadcast %7 : vector<16x1xf32> to vector<16x128xf32>
    %9 = arith.addf %6, %8 : vector<16x128xf32>
    %10 = vector.extract_strided_slice %9 {offsets = [0, 0], sizes = [8, 128], strides = [1, 1]} : vector<16x128xf32> to vector<8x128xf32>
    %c0_7 = arith.constant 0 : index
    %c0_8 = arith.constant 0 : index
    %11 = vector.load %arg5[%c0_7, %c0_8] : memref<2x128xf32, #tpu.memory_space<vmem>>, vector<1x128xf32>
    %c1 = arith.constant 1 : index
    %c0_9 = arith.constant 0 : index
    %12 = vector.load %arg5[%c1, %c0_9] : memref<2x128xf32, #tpu.memory_space<vmem>>, vector<1x128xf32>
    %c0_10 = arith.constant 0 : index
    %c0_11 = arith.constant 0 : index
    %13 = vector.load %arg9[%c0_10, %c0_11] : memref<8x1xf32, #tpu.memory_space<vmem>>, vector<8x1xf32>
    %cst_12 = arith.constant dense<0xFF800000> : vector<8xf32>
    %14 = vector.multi_reduction <maximumf>, %10, %cst_12 [1] : vector<8x128xf32> to vector<8xf32>
    %15 = vector.shape_cast %14 : vector<8xf32> to vector<8x1xf32>
    %16 = arith.maximumf %13, %15 : vector<8x1xf32>
    %17 = arith.subf %13, %16 : vector<8x1xf32>
    %18 = math.exp %17 : vector<8x1xf32>
    %19 = vector.broadcast %16 : vector<8x1xf32> to vector<8x128xf32>
    %20 = arith.subf %10, %19 : vector<8x128xf32>
    %21 = math.exp %20 : vector<8x128xf32>
    %c0_13 = arith.constant 0 : index
    %c0_14 = arith.constant 0 : index
    %22 = vector.load %arg10[%c0_13, %c0_14] : memref<8x1xf32, #tpu.memory_space<vmem>>, vector<8x1xf32>
    %23 = arith.mulf %18, %22 : vector<8x1xf32>
    %cst_15 = arith.constant dense<0.000000e+00> : vector<8xf32>
    %24 = vector.multi_reduction <add>, %21, %cst_15 [1] : vector<8x128xf32> to vector<8xf32>
    %25 = vector.shape_cast %24 : vector<8xf32> to vector<8x1xf32>
    %26 = arith.addf %23, %25 : vector<8x1xf32>
    %c0_16 = arith.constant 0 : index
    %c0_17 = arith.constant 0 : index
    %27 = vector.load %arg10[%c0_16, %c0_17] : memref<8x1xf32, #tpu.memory_space<vmem>>, vector<8x1xf32>
    tpu.vector_store %arg10[%c0_16, %c0_17], %26 {strides = array<i32>} : memref<8x1xf32, #tpu.memory_space<vmem>>, vector<8x1xf32>,
    %c0_18 = arith.constant 0 : index
    %c0_19 = arith.constant 0 : index
    %28 = vector.load %arg11[%c0_18, %c0_19] : memref<8x1xf32, #tpu.memory_space<vmem>>, vector<8x1xf32>
    %29 = arith.mulf %18, %28 : vector<8x1xf32>
    %30 = vector.broadcast %11 : vector<1x128xf32> to vector<8x128xf32>
    %31 = arith.mulf %21, %30 : vector<8x128xf32>
    %cst_20 = arith.constant dense<0.000000e+00> : vector<8xf32>
    %32 = vector.multi_reduction <add>, %31, %cst_20 [1] : vector<8x128xf32> to vector<8xf32>
    %33 = vector.shape_cast %32 : vector<8xf32> to vector<8x1xf32>
    %34 = arith.addf %29, %33 : vector<8x1xf32>
    %c0_21 = arith.constant 0 : index
    %c0_22 = arith.constant 0 : index
    %35 = vector.load %arg11[%c0_21, %c0_22] : memref<8x1xf32, #tpu.memory_space<vmem>>, vector<8x1xf32>
    tpu.vector_store %arg11[%c0_21, %c0_22], %34 {strides = array<i32>} : memref<8x1xf32, #tpu.memory_space<vmem>>, vector<8x1xf32>,
    %c0_23 = arith.constant 0 : index
    %c0_24 = arith.constant 0 : index
    %36 = vector.load %arg12[%c0_23, %c0_24] : memref<8x1xf32, #tpu.memory_space<vmem>>, vector<8x1xf32>
    %37 = arith.mulf %18, %36 : vector<8x1xf32>
    %38 = vector.broadcast %12 : vector<1x128xf32> to vector<8x128xf32>
    %39 = arith.mulf %21, %38 : vector<8x128xf32>
    %cst_25 = arith.constant dense<0.000000e+00> : vector<8xf32>
    %40 = vector.multi_reduction <add>, %39, %cst_25 [1] : vector<8x128xf32> to vector<8xf32>
    %41 = vector.shape_cast %40 : vector<8xf32> to vector<8x1xf32>
    %42 = arith.addf %37, %41 : vector<8x1xf32>
    %c0_26 = arith.constant 0 : index
    %c0_27 = arith.constant 0 : index
    %43 = vector.load %arg12[%c0_26, %c0_27] : memref<8x1xf32, #tpu.memory_space<vmem>>, vector<8x1xf32>
    tpu.vector_store %arg12[%c0_26, %c0_27], %42 {strides = array<i32>} : memref<8x1xf32, #tpu.memory_space<vmem>>, vector<8x1xf32>,
    %c0_28 = arith.constant 0 : index
    %c0_29 = arith.constant 0 : index
    %44 = vector.load %arg9[%c0_28, %c0_29] : memref<8x1xf32, #tpu.memory_space<vmem>>, vector<8x1xf32>
    tpu.vector_store %arg9[%c0_28, %c0_29], %16 {strides = array<i32>} : memref<8x1xf32, #tpu.memory_space<vmem>>, vector<8x1xf32>,
    %45 = vector.extract_strided_slice %21 {offsets = [4, 0], sizes = [4, 128], strides = [1, 1]} : vector<8x128xf32> to vector<4x128xf32>
    %c0_30 = arith.constant 0 : index
    %c0_31 = arith.constant 0 : index
    %c0_32 = arith.constant 0 : index
    %46 = vector.load %arg7[%c0_30, %c0_31, %c0_32] : memref<1x4x128xf32, #tpu.memory_space<vmem>>, vector<1x4x128xf32>
    %47 = vector.shape_cast %46 : vector<1x4x128xf32> to vector<4x128xf32>
    %48 = vector.shape_cast %45 : vector<4x128xf32> to vector<1x4x128xf32>
    tpu.vector_store %arg7[%c0_30, %c0_31, %c0_32], %48 {strides = array<i32>} : memref<1x4x128xf32, #tpu.memory_space<vmem>>, vector<1x4x128xf32>,
    %49 = vector.extract_strided_slice %9 {offsets = [8, 0], sizes = [8, 128], strides = [1, 1]} : vector<16x128xf32> to vector<8x128xf32>
    %c0_33 = arith.constant 0 : index
    %c0_34 = arith.constant 0 : index
    %c0_35 = arith.constant 0 : index
    %50 = vector.load %arg8[%c0_33, %c0_34, %c0_35] : memref<1x8x128xf32, #tpu.memory_space<vmem>>, vector<1x8x128xf32>
    %51 = vector.shape_cast %50 : vector<1x8x128xf32> to vector<8x128xf32>
    %52 = vector.shape_cast %49 : vector<8x128xf32> to vector<1x8x128xf32>
    tpu.vector_store %arg8[%c0_33, %c0_34, %c0_35], %52 {strides = array<i32>} : memref<1x8x128xf32, #tpu.memory_space<vmem>>, vector<1x8x128xf32>,
    %c0_i32_36 = arith.constant 0 : i32
    %53 = arith.cmpi eq, %arg1, %c0_i32_36 : i32
    %54 = arith.extui %53 : i1 to i32
    %c0_i32_37 = arith.constant 0 : i32
    %55 = arith.cmpi ne, %54, %c0_i32_37 : i32
    scf.if %55 {
      %c0_38 = arith.constant 0 : index
      %c0_39 = arith.constant 0 : index
      %56 = vector.load %arg10[%c0_38, %c0_39] : memref<8x1xf32, #tpu.memory_space<vmem>>, vector<8x1xf32>
      %cst_40 = arith.constant 1.000000e+00 : f32
      %57 = vector.broadcast %cst_40 : f32 to vector<8x1xf32>
      %58 = arith.divf %57, %56 : vector<8x1xf32>
      %c0_41 = arith.constant 0 : index
      %c0_42 = arith.constant 0 : index
      %59 = vector.load %arg11[%c0_41, %c0_42] : memref<8x1xf32, #tpu.memory_space<vmem>>, vector<8x1xf32>
      %c0_43 = arith.constant 0 : index
      %c0_44 = arith.constant 0 : index
      %60 = vector.load %arg12[%c0_43, %c0_44] : memref<8x1xf32, #tpu.memory_space<vmem>>, vector<8x1xf32>
      %61 = tpu.concatenate %59, %60 in 1 : vector<8x1xf32>, vector<8x1xf32> -> vector<8x2xf32>
      %62 = vector.broadcast %58 : vector<8x1xf32> to vector<8x2xf32>
      %63 = arith.mulf %61, %62 : vector<8x2xf32>
      %c0_45 = arith.constant 0 : index
      %c0_46 = arith.constant 0 : index
      %c0_47 = arith.constant 0 : index
      %64 = vector.load %arg6[%c0_45, %c0_46, %c0_47] : memref<1x8x2xf32, #tpu.memory_space<vmem>>, vector<1x8x2xf32>
      %65 = vector.shape_cast %64 : vector<1x8x2xf32> to vector<8x2xf32>
      %66 = vector.shape_cast %63 : vector<8x2xf32> to vector<1x8x2xf32>
      tpu.vector_store %arg6[%c0_45, %c0_46, %c0_47], %66 {strides = array<i32>} : memref<1x8x2xf32, #tpu.memory_space<vmem>>, vector<1x8x2xf32>,
      %c0_48 = arith.constant 0 : index
      %c0_49 = arith.constant 0 : index
      %c0_50 = arith.constant 0 : index
      %67 = vector.load %arg7[%c0_48, %c0_49, %c0_50] : memref<1x4x128xf32, #tpu.memory_space<vmem>>, vector<1x4x128xf32>
      %68 = vector.shape_cast %67 : vector<1x4x128xf32> to vector<4x128xf32>
      %69 = vector.extract_strided_slice %58 {offsets = [4, 0], sizes = [4, 1], strides = [1, 1]} : vector<8x1xf32> to vector<4x1xf32>
      %70 = vector.broadcast %69 : vector<4x1xf32> to vector<4x128xf32>
      %71 = arith.mulf %68, %70 : vector<4x128xf32>
      %c0_51 = arith.constant 0 : index
      %c0_52 = arith.constant 0 : index
      %c0_53 = arith.constant 0 : index
      %72 = vector.load %arg7[%c0_51, %c0_52, %c0_53] : memref<1x4x128xf32, #tpu.memory_space<vmem>>, vector<1x4x128xf32>
      %73 = vector.shape_cast %72 : vector<1x4x128xf32> to vector<4x128xf32>
      %74 = vector.shape_cast %71 : vector<4x128xf32> to vector<1x4x128xf32>
      tpu.vector_store %arg7[%c0_51, %c0_52, %c0_53], %74 {strides = array<i32>} : memref<1x4x128xf32, #tpu.memory_space<vmem>>, vector<1x4x128xf32>,
    } else {
    }
    return
  }
  func.func @transform_0(%arg0: i32, %arg1: i32) -> (i32, i32, i32) {
    %c0_i32 = arith.constant 0 : i32
    %c0_i32_0 = arith.constant 0 : i32
    return %arg0, %c0_i32, %arg1 : i32, i32, i32
  }
  func.func @transform_1(%arg0: i32, %arg1: i32) -> (i32, i32) {
    %c0_i32 = arith.constant 0 : i32
    %c0_i32_0 = arith.constant 0 : i32
    %c0_i32_1 = arith.constant 0 : i32
    return %c0_i32, %c0_i32_0 : i32, i32
  }
  func.func @transform_2(%arg0: i32, %arg1: i32) -> (i32, i32) {
    %c0_i32 = arith.constant 0 : i32
    %c0_i32_0 = arith.constant 0 : i32
    %c0_i32_1 = arith.constant 0 : i32
    return %c0_i32, %c0_i32_0 : i32, i32
  }
  func.func @transform_3(%arg0: i32, %arg1: i32) -> (i32, i32) {
    %c0_i32 = arith.constant 0 : i32
    %c0_i32_0 = arith.constant 0 : i32
    return %c0_i32, %arg1 : i32, i32
  }
  func.func @transform_4(%arg0: i32, %arg1: i32) -> (i32, i32, i32) {
    %c0_i32 = arith.constant 0 : i32
    %c0_i32_0 = arith.constant 0 : i32
    %c0_i32_1 = arith.constant 0 : i32
    return %arg0, %c0_i32, %c0_i32_0 : i32, i32, i32
  }
  func.func @transform_5(%arg0: i32, %arg1: i32) -> (i32, i32, i32) {
    %c0_i32 = arith.constant 0 : i32
    %c0_i32_0 = arith.constant 0 : i32
    %c0_i32_1 = arith.constant 0 : i32
    return %arg0, %c0_i32, %c0_i32_0 : i32, i32, i32
  }
  func.func @transform_6(%arg0: i32, %arg1: i32) -> (i32, i32, i32) {
    %c0_i32 = arith.constant 0 : i32
    %c0_i32_0 = arith.constant 0 : i32
    return %arg0, %c0_i32, %arg1 : i32, i32, i32
  }
}

</mosaic_0001>

<llo_original>
// kernel: tpu_custom_call.1
$region0: #{tpu_custom_call.1}
  #allocation0 [shape = 'u32[]', space=smem, size = 0x4, offset = 0x4, fixed_abs, tag = 'smem constant byte address 0x4 - core index']
  #allocation1 [shape = 'u32[144,128]{1,0:T(1,128)}', space=vmem, size = 0x12000, scoped, tag = 'internal scratch']
  #allocation2 [shape = 'f32[8,1]{1,0:T(8,128)}', space=vmem, size = 0x1000, scoped, tag = 'scratch operand']
  #allocation3 [shape = 'f32[8,1]{1,0:T(8,128)}', space=vmem, size = 0x1000, scoped, tag = 'scratch operand']
  #allocation4 [shape = 'f32[8,1]{1,0:T(8,128)}', space=vmem, size = 0x1000, scoped, tag = 'scratch operand']
  #allocation5 [shape = 'f32[8,1]{1,0:T(8,128)}', space=vmem, size = 0x1000, scoped, tag = 'scratch operand']
  %s0 = inlined_call_operand.vmem [shape: bf16[2,8,128], index: 0, kind: input, shape index: {}]
  %s1 = inlined_call_operand.vmem [shape: bf16[16,8], index: 1, kind: input, shape index: {}]
  %s2 = inlined_call_operand.vmem [shape: f32[16,1], index: 2, kind: input, shape index: {}]
  %s3 = inlined_call_operand.vmem [shape: f32[2,128], index: 3, kind: input, shape index: {}]
  %s4 = inlined_call_operand.vmem [shape: f32[2,8,2], index: 4, kind: output, shape index: {0}]
  %s5 = inlined_call_operand.hbm [shape: f32[2,4,128], index: 5, kind: output, shape index: {1}]
  %s6 = inlined_call_operand.hbm [shape: f32[2,8,128], index: 6, kind: output, shape index: {2}]
  %7 = xla_tuple %s4, %s5, %s6
  %s8 = sld [smem:[#allocation0]]
  $region73: #{tpu_custom_call.1} parent=0
    _
  %s10 = ssub.s32 1, %s8
  %s11 = scalar_select 0, %s10, %s8
  $region1: #{tpu_custom_call.1} parent=0
    #allocation6 [shape = 'u8[4096]{0}', space=vmem, size = 0x1000, scoped, tag = 'output window, operand 1']
    #allocation7 [shape = 's32[2]{0}', space=sflag, size = 0x8, scoped, tag = 'scoped memory for tpu_custom_call.1']
    #allocation8 [shape = 'u8[8192]{0}', space=vmem, size = 0x2000, scoped, tag = 'output window, operand 2']
    #allocation9 [shape = 's32[2]{0}', space=sflag, size = 0x8, scoped, tag = 'scoped memory for tpu_custom_call.1']
    %12 = vsyncpa [#allocation7], 0
    %s13 = scalar_lea.sflag [#allocation7], 1
    %14 = vsyncpa %s13, 0
    %15 = vsyncpa [#allocation9], 0
    %s16 = scalar_lea.sflag [#allocation9], 1
    %17 = vsyncpa %s16, 0
    loop: start=0, step=1, limit=4
    $region2: #{tpu_custom_call.1} parent=1 // loop_pre_header
      _
    $region3: #{tpu_custom_call.1} parent=1 // loop_header
      %s19 = sphi 0, %s23
      %p20 = scmp.ge.s32.totalorder %s19, 4
      %s26 = sphi 0, %s38
      %s27 = sphi 0, %s34
      %s28 = sphi 0, %s26
      %s29 = sphi 0, %s27
      %s30 = sphi 0, %s28
      %s31 = sphi 0, %s29
      %s43 = sphi 0, %s45
      %s46 = sphi 0, %s43
      %s47 = sphi 0, %s46
      %s63 = sphi 0, %s47
      %s67 = sphi 0, %s67
      %s69 = sphi 0, %s67
      %s70 = sphi 0, %s69
      %s84 = sphi 0, %s70
      %s88 = sphi 0, %s88
      %s90 = sphi 0, %s88
      %s91 = sphi 0, %s90
      %s105 = sphi 0, %s91
      %s111 = sphi 0, %s113
      %s114 = sphi 0, %s111
      %s115 = sphi 0, %s114
      %s131 = sphi 0, %s115
      %s137 = sphi 0, %s139
      %s140 = sphi 0, %s137
      %s141 = sphi 0, %s140
      %s157 = sphi 0, %s141
      %s163 = sphi 0, %s165
      %s166 = sphi 0, %s163
      %s167 = sphi 0, %s166
      %s183 = sphi 0, %s167
      %s191 = sphi 0, %s193
      %s194 = sphi 0, %s191
      %s195 = sphi 0, %s194
      %s211 = sphi 0, %s195
    $region4: #{tpu_custom_call.1} parent=1 // loop_header_branch
      %22 = sbr.rel (%p20) target = $region8
    $region5: #{tpu_custom_call.1} parent=1 // loop_body
      %s24 = ssub.s32 %s19, 1
      %s25 = ssub.s32 %s19, 2
      %s32 = sadd.s32 1, %s27
      %p33 = scmp.ge.s32.totalorder %s32, 1
      %s34 = scalar_select %p33, 0, %s32
      %s35 = sadd.s32 1, %s26
      %s36 = scalar_select %p33, %s35, %s26
      %p37 = scmp.ge.s32.totalorder %s36, 2
      %s38 = scalar_select %p37, 0, %s36
      %s39 = ssub.s32 %s26, %s38
      %s40 = ssub.s32 %s27, %s34
      %s41 = sor.u32 %s39, %s40
      %p42 = scmp.eq.s32.totalorder %s41, 0
      %s44 = sadd.s32 %s43, 1
      %s45 = scalar_select %p42, %s43, %s44
      %p48 = pneg %p42
      %p49 = scmp.eq.s32.totalorder %s19, 1
      %p50 = por %p48, %p49
      %p51 = scmp.ne.s32.totalorder %s43, %s46
      %p52 = scmp.eq.s32.totalorder %s19, 0
      %p53 = por %p51, %p52
      %p54 = scmp.ne.s32.totalorder %s43, %s46
      %p55 = scmp.eq.s32.totalorder %s24, 1
      %p56 = por %p54, %p55
      %p57 = scmp.ne.s32.totalorder %s46, %s47
      %p58 = scmp.eq.s32.totalorder %s24, 0
      %p59 = por %p57, %p58
      %p60 = scmp.ne.s32.totalorder %s46, %s47
      %p61 = scmp.eq.s32.totalorder %s25, 1
      %p62 = por %p60, %p61
      %p64 = scmp.ne.s32.totalorder %s47, %s63
      %p65 = scmp.eq.s32.totalorder %s25, 0
      %p66 = por %p64, %p65
      %s68 = sadd.s32 %s67, 1
      %p71 = scmp.eq.s32.totalorder %s19, 1
      %p72 = scmp.ne.s32.totalorder %s67, %s69
      %p73 = scmp.eq.s32.totalorder %s19, 0
      %p74 = por %p72, %p73
      %p75 = scmp.ne.s32.totalorder %s67, %s69
      %p76 = scmp.eq.s32.totalorder %s24, 1
      %p77 = por %p75, %p76
      %p78 = scmp.ne.s32.totalorder %s69, %s70
      %p79 = scmp.eq.s32.totalorder %s24, 0
      %p80 = por %p78, %p79
      %p81 = scmp.ne.s32.totalorder %s69, %s70
      %p82 = scmp.eq.s32.totalorder %s25, 1
      %p83 = por %p81, %p82
      %p85 = scmp.ne.s32.totalorder %s70, %s84
      %p86 = scmp.eq.s32.totalorder %s25, 0
      %p87 = por %p85, %p86
      %s89 = sadd.s32 %s88, 1
      %p92 = scmp.eq.s32.totalorder %s19, 1
      %p93 = scmp.ne.s32.totalorder %s88, %s90
      %p94 = scmp.eq.s32.totalorder %s19, 0
      %p95 = por %p93, %p94
      %p96 = scmp.ne.s32.totalorder %s88, %s90
      %p97 = scmp.eq.s32.totalorder %s24, 1
      %p98 = por %p96, %p97
      %p99 = scmp.ne.s32.totalorder %s90, %s91
      %p100 = scmp.eq.s32.totalorder %s24, 0
      %p101 = por %p99, %p100
      %p102 = scmp.ne.s32.totalorder %s90, %s91
      %p103 = scmp.eq.s32.totalorder %s25, 1
      %p104 = por %p102, %p103
      %p106 = scmp.ne.s32.totalorder %s91, %s105
      %p107 = scmp.eq.s32.totalorder %s25, 0
      %p108 = por %p106, %p107
      %s109 = ssub.s32 %s27, %s34
      %p110 = scmp.eq.s32.totalorder %s109, 0
      %s112 = sadd.s32 %s111, 1
      %s113 = scalar_select %p110, %s111, %s112
      %p116 = pneg %p110
      %p117 = scmp.eq.s32.totalorder %s19, 1
      %p118 = por %p116, %p117
      %p119 = scmp.ne.s32.totalorder %s111, %s114
      %p120 = scmp.eq.s32.totalorder %s19, 0
      %p121 = por %p119, %p120
      %p122 = scmp.ne.s32.totalorder %s111, %s114
      %p123 = scmp.eq.s32.totalorder %s24, 1
      %p124 = por %p122, %p123
      %p125 = scmp.ne.s32.totalorder %s114, %s115
      %p126 = scmp.eq.s32.totalorder %s24, 0
      %p127 = por %p125, %p126
      %p128 = scmp.ne.s32.totalorder %s114, %s115
      %p129 = scmp.eq.s32.totalorder %s25, 1
      %p130 = por %p128, %p129
      %p132 = scmp.ne.s32.totalorder %s115, %s131
      %p133 = scmp.eq.s32.totalorder %s25, 0
      %p134 = por %p132, %p133
      %s135 = ssub.s32 %s26, %s38
      %p136 = scmp.eq.s32.totalorder %s135, 0
      %s138 = sadd.s32 %s137, 1
      %s139 = scalar_select %p136, %s137, %s138
      %p142 = pneg %p136
      %p143 = scmp.eq.s32.totalorder %s19, 1
      %p144 = por %p142, %p143
      %p145 = scmp.ne.s32.totalorder %s137, %s140
      %p146 = scmp.eq.s32.totalorder %s19, 0
      %p147 = por %p145, %p146
      %p148 = scmp.ne.s32.totalorder %s137, %s140
      %p149 = scmp.eq.s32.totalorder %s24, 1
      %p150 = por %p148, %p149
      %p151 = scmp.ne.s32.totalorder %s140, %s141
      %p152 = scmp.eq.s32.totalorder %s24, 0
      %p153 = por %p151, %p152
      %p154 = scmp.ne.s32.totalorder %s140, %s141
      %p155 = scmp.eq.s32.totalorder %s25, 1
      %p156 = por %p154, %p155
      %p158 = scmp.ne.s32.totalorder %s141, %s157
      %p159 = scmp.eq.s32.totalorder %s25, 0
      %p160 = por %p158, %p159
      %s161 = ssub.s32 %s26, %s38
      %p162 = scmp.eq.s32.totalorder %s161, 0
      %s164 = sadd.s32 %s163, 1
      %s165 = scalar_select %p162, %s163, %s164
      %p168 = pneg %p162
      %p169 = scmp.eq.s32.totalorder %s19, 1
      %p170 = por %p168, %p169
      %p171 = scmp.ne.s32.totalorder %s163, %s166
      %p172 = scmp.eq.s32.totalorder %s19, 0
      %p173 = por %p171, %p172
      %p174 = scmp.ne.s32.totalorder %s163, %s166
      %p175 = scmp.eq.s32.totalorder %s24, 1
      %p176 = por %p174, %p175
      %p177 = scmp.ne.s32.totalorder %s166, %s167
      %p178 = scmp.eq.s32.totalorder %s24, 0
      %p179 = por %p177, %p178
      %p180 = scmp.ne.s32.totalorder %s166, %s167
      %p181 = scmp.eq.s32.totalorder %s25, 1
      %p182 = por %p180, %p181
      %p184 = scmp.ne.s32.totalorder %s167, %s183
      %p185 = scmp.eq.s32.totalorder %s25, 0
      %p186 = por %p184, %p185
      %s187 = ssub.s32 %s26, %s38
      %s188 = ssub.s32 %s27, %s34
      %s189 = sor.u32 %s187, %s188
      %p190 = scmp.eq.s32.totalorder %s189, 0
      %s192 = sadd.s32 %s191, 1
      %s193 = scalar_select %p190, %s191, %s192
      %p196 = pneg %p190
      %p197 = scmp.eq.s32.totalorder %s19, 1
      %p198 = por %p196, %p197
      %p199 = scmp.ne.s32.totalorder %s191, %s194
      %p200 = scmp.eq.s32.totalorder %s19, 0
      %p201 = por %p199, %p200
      %p202 = scmp.ne.s32.totalorder %s191, %s194
      %p203 = scmp.eq.s32.totalorder %s24, 1
      %p204 = por %p202, %p203
      %p205 = scmp.ne.s32.totalorder %s194, %s195
      %p206 = scmp.eq.s32.totalorder %s24, 0
      %p207 = por %p205, %p206
      %p208 = scmp.ne.s32.totalorder %s194, %s195
      %p209 = scmp.eq.s32.totalorder %s25, 1
      %p210 = por %p208, %p209
      %p212 = scmp.ne.s32.totalorder %s195, %s211
      %p213 = scmp.eq.s32.totalorder %s25, 0
      %p214 = por %p212, %p213
      %p215 = scmp.le.s32.totalorder 1, %s19
      %p216 = scmp.lt.s32.totalorder %s19, 3
      %p217 = pnand %p215, %p216
      %p218 = pneg %p217
      // Predicated region
      $region9: #{tpu_custom_call.1} parent=5 // pred_check
        _
      $region10: #{tpu_custom_call.1} parent=5 // pred_check_branch
        %220 = sbr.rel (%p217) target = $region12
      $region11: #{tpu_custom_call.1} parent=5 // pred_region
        %s221 = ssub.s32 %s19, 1
        // Predicated region
        $region13: #{tpu_custom_call.1} parent=11 // pred_check
          %p222 = pneg %p80
        $region14: #{tpu_custom_call.1} parent=11 // pred_check_branch
          %224 = sbr.rel (%p222) target = $region16
        $region15: #{tpu_custom_call.1} parent=11 // pred_region
          _
        $region16: #{tpu_custom_call.1} parent=11 // pred_fallthru
          _
        // Predicated region
        $region17: #{tpu_custom_call.1} parent=11 // pred_check
          %p225 = pneg %p101
        $region18: #{tpu_custom_call.1} parent=11 // pred_check_branch
          %227 = sbr.rel (%p225) target = $region20
        $region19: #{tpu_custom_call.1} parent=11 // pred_region
          _
        $region20: #{tpu_custom_call.1} parent=11 // pred_fallthru
          _
        // Predicated region
        $region21: #{tpu_custom_call.1} parent=11 // pred_check
          %p228 = pneg %p127
        $region22: #{tpu_custom_call.1} parent=11 // pred_check_branch
          %230 = sbr.rel (%p228) target = $region24
        $region23: #{tpu_custom_call.1} parent=11 // pred_region
          %p231 = scmp.lt.s32.totalorder %s29, 0
          %s232 = scalar_select %p231, %s29, 0
          %s233 = smul.addr %s232, 2
          %s234 = scalar_lea.vmem %s3, %s233
        $region24: #{tpu_custom_call.1} parent=11 // pred_fallthru
          _
      $region12: #{tpu_custom_call.1} parent=5 // pred_fallthru
        _
      %p235 = scmp.lt.s32.totalorder %s19, 2
      // Predicated region
      $region25: #{tpu_custom_call.1} parent=5 // pred_check
        %p236 = pneg %p235
      $region26: #{tpu_custom_call.1} parent=5 // pred_check_branch
        %238 = sbr.rel (%p236) target = $region28
      $region27: #{tpu_custom_call.1} parent=5 // pred_region
        // Predicated region
        $region29: #{tpu_custom_call.1} parent=27 // pred_check
          %p239 = pneg %p53
        $region30: #{tpu_custom_call.1} parent=27 // pred_check_branch
          %241 = sbr.rel (%p239) target = $region32
        $region31: #{tpu_custom_call.1} parent=27 // pred_region
          %p242 = scmp.lt.s32.totalorder %s26, 1
          %s243 = scalar_select %p242, %s26, 1
          %p244 = scmp.lt.s32.totalorder %s27, 0
          %s245 = scalar_select %p244, %s27, 0
          %s246 = sadd.s32 %s245, %s243
          %s247 = smul.addr %s246, 4
          %s248 = scalar_lea.vmem %s0, %s247
        $region32: #{tpu_custom_call.1} parent=27 // pred_fallthru
          _
      $region28: #{tpu_custom_call.1} parent=5 // pred_fallthru
        _
      %p249 = scmp.le.s32.totalorder 1, %s19
      %p250 = scmp.lt.s32.totalorder %s19, 3
      %p251 = pnand %p249, %p250
      %p252 = pneg %p251
      // Predicated region
      $region33: #{tpu_custom_call.1} parent=5 // pred_check
        _
      $region34: #{tpu_custom_call.1} parent=5 // pred_check_branch
        %254 = sbr.rel (%p251) target = $region36
      $region35: #{tpu_custom_call.1} parent=5 // pred_region
        %s255 = ssub.s32 %s19, 1
        %p256 = scmp.lt.s32.totalorder %s28, 1
        %s257 = scalar_select %p256, %s28, 1
        %p258 = scmp.lt.s32.totalorder %s29, 0
        %s259 = scalar_select %p258, %s29, 0
        %s260 = sadd.s32 %s259, %s257
        %s261 = smul.addr %s260, 4
        %s262 = scalar_lea.vmem %s0, %s261
        %p263 = pneg %p59
        %p264 = pneg %p56
        %p265 = pneg %p80
        %p266 = pneg %p77
        %p267 = pneg %p101
        %p268 = pneg %p98
        %p269 = scmp.lt.s32.totalorder %s29, 0
        %s270 = scalar_select %p269, %s29, 0
        %s271 = smul.addr %s270, 2
        %s272 = scalar_lea.vmem %s3, %s271
        %p273 = pneg %p127
        %p274 = pneg %p124
        %p275 = pneg %p153
        %p276 = pneg %p150
        %p277 = scmp.lt.s32.totalorder %s28, 1
        %s278 = scalar_select %p277, %s28, 1
        %s279 = smul.addr %s278, 8
        %s280 = scalar_lea.vmem %s4, %s279
        %p281 = pneg %p179
        %p282 = pneg %p176
        %s283 = sand.u32 %s166, 1
        %s284 = scalar_lea.sflag [#allocation7], %s283
        %s285 = sand.u32 %s166, 1
        %s286 = smul.addr %s285, 4
        %s287 = scalar_lea.vmem [#allocation6], %s286
        %p288 = pneg %p207
        %p289 = pneg %p204
        %s290 = sand.u32 %s194, 1
        %s291 = scalar_lea.sflag [#allocation9], %s290
        %s292 = sand.u32 %s194, 1
        %s293 = smul.addr %s292, 8
        %s294 = scalar_lea.vmem [#allocation8], %s293
        %p295 = scmp.lt.s32.totalorder %s28, 1
        %s296 = scalar_select %p295, %s28, 1
        %p297 = scmp.lt.s32.totalorder %s29, 0
        %s298 = scalar_select %p297, %s29, 0
        %s299 = sadd.s32 %s298, %s296
        %s300 = smul.addr %s299, 4
        %s301 = scalar_lea.vmem %s0, %s300
        %p302 = scmp.lt.s32.totalorder %s29, 0
        %s303 = scalar_select %p302, %s29, 0
        %s304 = smul.addr %s303, 2
        %s305 = scalar_lea.vmem %s3, %s304
        %p306 = scmp.lt.s32.totalorder %s28, 1
        %s307 = scalar_select %p306, %s28, 1
        %s308 = smul.addr %s307, 8
        %s309 = scalar_lea.vmem %s4, %s308
        %p311 = scmp.eq.s32.totalorder %s29, 0
        // Predicated region
        $region37: #{tpu_custom_call.1} parent=35 // pred_check
          %p312 = pneg %p311
        $region38: #{tpu_custom_call.1} parent=35 // pred_check_branch
          %314 = sbr.rel (%p312) target = $region40
        $region39: #{tpu_custom_call.1} parent=35 // pred_region
          %vm315 = vcmask 7168
          %316 = vst.msk [vmem:[#allocation2] sm:$0xff] %vm315, -inf
          %317 = vst.msk [vmem:[#allocation3] sm:$0xff] %vm315, 0.0
          %318 = vst.msk [vmem:[#allocation4] sm:$0xff] %vm315, 0.0
          %319 = vst.msk [vmem:[#allocation5] sm:$0xff] %vm315, 0.0
          %320 = vst [vmem:[%s287] sm:$0xf] 0.0
          %vm321 = vcmask 15360
          %322 = vst.msk [vmem:[%s309] sm:$0xff] %vm321, 0.0
        $region40: #{tpu_custom_call.1} parent=35 // pred_fallthru
          _
        %v323 = vld [vmem:[%s1] sm:$0xf]
        %v324 = vld [vmem:[%s1 + $0x4] sm:$0xf]
        %v325 = vld [vmem:[%s301] sm:$0xf]
        %v326 = vld [vmem:[%s2] sm:$0xff]
        %v327 = vld [vmem:[%s2 + $0x8] sm:$0xff]
        %329 = vset.pattern.permute.xlu0 0
        %330 = vperm.xlu0 %329, %v326
        %v331 = vpop.permute.xlu0 %330
        %334 = vset.pattern.permute.xlu0 0
        %335 = vperm.xlu0 %334, %v327
        %v336 = vpop.permute.xlu0 %335
        %v340 = vunpack.c.l.b16 %v323
        %v341 = vunpack.c.l.b16 %v324
        %v342 = vpack.c.b16 %v341, %v340
        %vm343 = vcmask 64512
        %v345 = vsel %vm343, %v342, 0
        %vm347 = vcmask 1043456
        %v349 = vsel %vm347, %v325, 0
        %351 = vmatprep.subr.bf16.mxu0 0
        %352 = vmatpush1.bf16.msra.mxu0 0
        %353 = vmatprep.subr.bf16.mxu0 0
        %354 = vmatpush1.bf16.msra.mxu0 0
        %355 = vmatprep.subr.bf16.mxu0 0
        %356 = vmatpush1.bf16.msra.mxu0 0
        %357 = vmatprep.subr.bf16.mxu0 0
        %358 = vmatpush1.bf16.msra.mxu0 0
        %359 = vmatprep.subr.bf16.mxu0 0
        %360 = vmatpush1.bf16.msra.mxu0 0
        %361 = vmatprep.subr.bf16.mxu0 0
        %362 = vmatpush1.bf16.msra.mxu0 0
        %363 = vmatprep.subr.bf16.mxu0 0
        %364 = vmatpush1.bf16.msra.mxu0 0
        %365 = vmatprep.subr.bf16.mxu0 0
        %366 = vmatpush1.bf16.msra.mxu0 %v349
        %367 = vmatprep.subr.bf16.mxu0 0
        %368 = vmatpush2.bf16.msra.mxu0 0
        %369 = vmatprep.subr.bf16.mxu0 0
        %370 = vmatpush2.bf16.msra.mxu0 0
        %371 = vmatprep.subr.bf16.mxu0 0
        %372 = vmatpush2.bf16.msra.mxu0 0
        %373 = vmatprep.subr.bf16.mxu0 0
        %374 = vmatpush2.bf16.msra.mxu0 0
        %375 = vmatprep.subr.bf16.mxu0 0
        %376 = vmatpush2.bf16.msra.mxu0 0
        %377 = vmatprep.subr.bf16.mxu0 0
        %378 = vmatpush2.bf16.msra.mxu0 0
        %379 = vmatprep.subr.bf16.mxu0 0
        %380 = vmatpush2.bf16.msra.mxu0 0
        %381 = vmatprep.subr.bf16.mxu0 0
        %382 = vmatpush2.bf16.msra.mxu0 0
        %383 = vmatprep.mubr.bf16.mxu0 0
        %384 = vmatmul.mubr.bf16.gmra.mxu0 %v345
        %v385 = vpop.f32.mrf.mxu0
        %v386 = vadd.f32 %v331, %v385
        %v387 = vpop.f32.mrf.mxu0
        %v388 = vpop.f32.mrf.mxu0
        %v389 = vadd.f32 %v336, %v388
        %v390 = vpop.f32.mrf.mxu0
        %391 = vdwg.mxu0
        %v392 = vld [vmem:[%s305] sm:$0x1]
        %v393 = vld [vmem:[%s305 + $0x1] sm:$0x1]
        %v394 = vld [vmem:[#allocation2] sm:$0xff]
        %395 = vmax.xlane.f32.xlu0 %v386
        %v396 = vpop.xlane.xlu0 %395
        %v397 = vmax.f32 %v394, %v396
        %v398 = vsub.f32 %v394, %v397
        %v399 = vmul.f32 %v398, 1.442695
        %v400 = vpow.pop %v399
        %402 = vset.pattern.permute.xlu0 0
        %403 = vperm.xlu0 %402, %v397
        %v404 = vpop.permute.xlu0 %403
        %v406 = vsub.f32 %v386, %v404
        %v407 = vmul.f32 %v406, 1.442695
        %v408 = vpow.pop %v407
        %v409 = vld [vmem:[#allocation3] sm:$0xff]
        %v410 = vmul.f32 %v400, %v409
        %411 = vadd.xlane.f32.xlu0 %v408
        %v412 = vpop.xlane.xlu0 %411
        %v413 = vadd.f32 %v410, %v412
        %vm414 = vcmask 7168
        %415 = vst.msk [vmem:[#allocation3] sm:$0xff] %vm414, %v413
        %v416 = vld [vmem:[#allocation4] sm:$0xff]
        %v417 = vmul.f32 %v400, %v416
        %v418 = vlaneseq
        %v419 = vshrl.u32 %v418, 7
        %v420 = vsub.s32 0, %v419
        %v421 = vrot.slane %v392, %v420
        %v422 = vmul.f32 %v408, %v421
        %423 = vadd.xlane.f32.xlu0 %v422
        %v424 = vpop.xlane.xlu0 %423
        %v425 = vadd.f32 %v417, %v424
        %426 = vst.msk [vmem:[#allocation4] sm:$0xff] %vm414, %v425
        %v427 = vld [vmem:[#allocation5] sm:$0xff]
        %v428 = vmul.f32 %v400, %v427
        %v429 = vlaneseq
        %v430 = vshrl.u32 %v429, 7
        %v431 = vsub.s32 0, %v430
        %v432 = vrot.slane %v393, %v431
        %v433 = vmul.f32 %v408, %v432
        %434 = vadd.xlane.f32.xlu0 %v433
        %v435 = vpop.xlane.xlu0 %434
        %v436 = vadd.f32 %v428, %v435
        %437 = vst.msk [vmem:[#allocation5] sm:$0xff] %vm414, %v436
        %438 = vst.msk [vmem:[#allocation2] sm:$0xff] %vm414, %v397
        %439 = vst [vmem:[%s287 - $0x4] sm:$0xf0] %v408
        %440 = vst [vmem:[%s294] sm:$0xff] %v389
        // Predicated region
        $region41: #{tpu_custom_call.1} parent=35 // pred_check
          %p441 = pneg %p311
        $region42: #{tpu_custom_call.1} parent=35 // pred_check_branch
          %443 = sbr.rel (%p441) target = $region44
        $region43: #{tpu_custom_call.1} parent=35 // pred_region
          %v444 = vld [vmem:[#allocation3] sm:$0xff]
          %v445 = vrcp.pop %v444
          %v446 = vmul.f32 1.0, %v445
          %v447 = vld [vmem:[#allocation4] sm:$0xff]
          %v448 = vld [vmem:[#allocation5] sm:$0xff]
          %450 = vrot.lane.b32.xlu0 %v448, 1
          %v451 = vpop.permute.xlu0 %450
          %v453 = vsel %vm414, %v447, %v451
          %455 = vset.pattern.permute.xlu0 0
          %456 = vperm.xlu0 %455, %v446
          %v457 = vpop.permute.xlu0 %456
          %v459 = vmul.f32 %v453, %v457
          %vm460 = vcmask 15360
          %461 = vst.msk [vmem:[%s309] sm:$0xff] %vm460, %v459
          %v462 = vld [vmem:[%s287] sm:$0xf]
          %v463 = vrot.slane %v457, 4
          %v465 = vmul.f32 %v462, %v463
          %466 = vst [vmem:[%s287] sm:$0xf] %v465
        $region44: #{tpu_custom_call.1} parent=35 // pred_fallthru
          _
        %p467 = scmp.lt.s32.totalorder %s28, 1
        %s468 = scalar_select %p467, %s28, 1
        %s469 = smul.addr %s468, 8
        %s470 = scalar_lea.vmem %s4, %s469
        %s471 = sand.u32 %s166, 1
        %s472 = scalar_lea.sflag [#allocation7], %s471
        %s473 = sand.u32 %s166, 1
        %s474 = smul.addr %s473, 4
        %s475 = scalar_lea.vmem [#allocation6], %s474
        %s476 = sand.u32 %s194, 1
        %s477 = scalar_lea.sflag [#allocation9], %s476
        %s478 = sand.u32 %s194, 1
        %s479 = smul.addr %s478, 8
        %s480 = scalar_lea.vmem [#allocation8], %s479
        // Predicated region
        $region45: #{tpu_custom_call.1} parent=35 // pred_check
          %p481 = pneg %p150
        $region46: #{tpu_custom_call.1} parent=35 // pred_check_branch
          %483 = sbr.rel (%p481) target = $region48
        $region47: #{tpu_custom_call.1} parent=35 // pred_region
          _
        $region48: #{tpu_custom_call.1} parent=35 // pred_fallthru
          _
        // Predicated region
        $region49: #{tpu_custom_call.1} parent=35 // pred_check
          %p484 = pneg %p176
        $region50: #{tpu_custom_call.1} parent=35 // pred_check_branch
          %486 = sbr.rel (%p484) target = $region52
        $region51: #{tpu_custom_call.1} parent=35 // pred_region
          %s488 = ssub.s32 64, 64
          %489 = vsyncadd %s472, %s488
          %s490 = smul.addr %s28, 64
          %s491 = scalar_lea.hbm %s5, %s490
          %s493 = sshll.u32 %s475, 4
          %s494 = int_to_ptr.vmem [resolvable:$true] %s493
          %496 = dma.vmem_to_hbm [thread:$0]  %s494, 64, %s491, %s472
        $region52: #{tpu_custom_call.1} parent=35 // pred_fallthru
          _
        // Predicated region
        $region53: #{tpu_custom_call.1} parent=35 // pred_check
          %p497 = pneg %p204
        $region54: #{tpu_custom_call.1} parent=35 // pred_check_branch
          %499 = sbr.rel (%p497) target = $region56
        $region55: #{tpu_custom_call.1} parent=35 // pred_region
          %s501 = ssub.s32 128, 128
          %502 = vsyncadd %s477, %s501
          %s503 = sadd.s32 %s29, %s28
          %s504 = smul.addr %s503, 128
          %s505 = scalar_lea.hbm %s6, %s504
          %s507 = sshll.u32 %s480, 4
          %s508 = int_to_ptr.vmem [resolvable:$true] %s507
          %510 = dma.vmem_to_hbm [thread:$0]  %s508, 128, %s505, %s477
        $region56: #{tpu_custom_call.1} parent=35 // pred_fallthru
          _
      $region36: #{tpu_custom_call.1} parent=5 // pred_fallthru
        _
      %p511 = scmp.le.s32.totalorder 2, %s19
      // Predicated region
      $region57: #{tpu_custom_call.1} parent=5 // pred_check
        %p512 = pneg %p511
      $region58: #{tpu_custom_call.1} parent=5 // pred_check_branch
        %514 = sbr.rel (%p512) target = $region60
      $region59: #{tpu_custom_call.1} parent=5 // pred_region
        %s515 = ssub.s32 %s19, 2
        // Predicated region
        $region61: #{tpu_custom_call.1} parent=59 // pred_check
          %p516 = pneg %p156
        $region62: #{tpu_custom_call.1} parent=59 // pred_check_branch
          %518 = sbr.rel (%p516) target = $region64
        $region63: #{tpu_custom_call.1} parent=59 // pred_region
          %p519 = scmp.lt.s32.totalorder %s30, 1
          %s520 = scalar_select %p519, %s30, 1
          %s521 = smul.addr %s520, 8
          %s522 = scalar_lea.vmem %s4, %s521
        $region64: #{tpu_custom_call.1} parent=59 // pred_fallthru
          _
        // Predicated region
        $region65: #{tpu_custom_call.1} parent=59 // pred_check
          %p523 = pneg %p182
        $region66: #{tpu_custom_call.1} parent=59 // pred_check_branch
          %525 = sbr.rel (%p523) target = $region68
        $region67: #{tpu_custom_call.1} parent=59 // pred_region
          %s526 = sand.u32 %s167, 1
          %s527 = scalar_lea.sflag [#allocation7], %s526
          %s528 = sand.u32 %s167, 1
          %s529 = smul.addr %s528, 4
          %s530 = scalar_lea.vmem [#allocation6], %s529
          %531 = dma.done %s527, 64
        $region68: #{tpu_custom_call.1} parent=59 // pred_fallthru
          _
        // Predicated region
        $region69: #{tpu_custom_call.1} parent=59 // pred_check
          %p532 = pneg %p210
        $region70: #{tpu_custom_call.1} parent=59 // pred_check_branch
          %534 = sbr.rel (%p532) target = $region72
        $region71: #{tpu_custom_call.1} parent=59 // pred_region
          %s535 = sand.u32 %s195, 1
          %s536 = scalar_lea.sflag [#allocation9], %s535
          %s537 = sand.u32 %s195, 1
          %s538 = smul.addr %s537, 8
          %s539 = scalar_lea.vmem [#allocation8], %s538
          %540 = dma.done %s536, 128
        $region72: #{tpu_custom_call.1} parent=59 // pred_fallthru
          _
      $region60: #{tpu_custom_call.1} parent=5 // pred_fallthru
        _
    $region6: #{tpu_custom_call.1} parent=1 // loop_footer
      %s23 = sadd.s32 1, %s19
    $region7: #{tpu_custom_call.1} parent=1 // loop_footer_branch
      %18 = sbr.rel target = $region3
    $region8: #{tpu_custom_call.1} parent=1 // loop_exit
      _
    %541 = vsyncpa [#allocation7], 1
    %s542 = scalar_lea.sflag [#allocation7], 1
    %543 = vsyncpa %s542, 1
    %544 = vsyncpa [#allocation9], 1
    %s545 = scalar_lea.sflag [#allocation9], 1
    %546 = vsyncpa %s545, 1

</llo_original>
